<compile_context>
chip_gen: v5e
topology: v5e:2x2
jax: 0.10.0
libtpu: 0.0.40
codegen_flags: <defaults>
</compile_context>

<pallas_src>
import jax
import jax.numpy as jnp
from jax import lax
from jax.experimental import pallas as pl
from jax.experimental.pallas import tpu as pltpu


def _round_up(x, m):
    return ((x + m - 1) // m) * m


# ---------------------------------------------------------------------------
# Kernel
# ---------------------------------------------------------------------------
def _make_kernel(D, P, OUT, compute_dtype):
    """Kernel over one row-block of TB rows; all feature math is P lanes wide."""

    def kernel(data_ref, scal_ref, w_ref, b_ref, out_ref):
        f32 = jnp.float32

        # Per-row scalars: chosen alphas_bar[t] and t / total_time.
        ab = scal_ref[:, 0:1]                      # (TB, 1)
        tn = scal_ref[:, 1:2]                      # (TB, 1)
        sab = jnp.sqrt(ab)                         # EUP, otherwise-idle slot
        s1ab = jnp.sqrt(1.0 - ab)

        # Packed row data: lanes [0:2D) = [x | prior], lanes [P:P+D) = noise.
        xp = data_ref[:, 0:P]                      # [x | prior | 0-pad]
        nz = data_ref[:, P:2 * P]                  # [noise | 0-pad]

        # Diffusion noising only on the x lanes; prior lanes pass through.
        lane = lax.broadcasted_iota(jnp.int32, xp.shape, 1)
        sab_b = jnp.broadcast_to(sab, xp.shape)
        scale = jnp.where(lane < D, sab_b, 1.0)
        fused = xp * scale + nz * s1ab             # [noisy | prior | 0], f32

        # Static, tile-aligned slices of the packed weight / bias slabs.
        w1 = w_ref[0 * P:1 * P, :]                 # blockdiag(we1, wp1)
        w2 = w_ref[1 * P:2 * P, :]                 # blockdiag(we2, wp2)
        w3 = w_ref[2 * P:3 * P, :]                 # wd1[:2L]  (acts on [x1|x2])
        w4 = w_ref[3 * P:4 * P, :]                 # wd2
        b1, b2 = b_ref[0:1, :], b_ref[1:2, :]
        bd1, bd2 = b_ref[2:3, :], b_ref[3:4, :]
        wt = b_ref[4:5, :]                         # t-column of decoder Linear 1

        # Fused encoder / encoder_prior: Linear -> ReLU -> Linear.
        h = jnp.dot(fused.astype(compute_dtype), w1,
                    preferred_element_type=f32) + b1
        h = jnp.maximum(h, 0.0)
        xl = jnp.dot(h.astype(compute_dtype), w2,
                     preferred_element_type=f32) + b2   # [x1 | x2 | 0]

        # Decoder: concat([x1, x2, t]) @ Wd1 decomposed -> ReLU -> Linear.
        z = (jnp.dot(xl.astype(compute_dtype), w3, preferred_element_type=f32)
             + tn * wt + bd1)
        z = jnp.maximum(z, 0.0)
        o = jnp.dot(z.astype(compute_dtype), w4,
                    preferred_element_type=f32) + bd2

        out_ref[...] = o[:, 0:OUT].astype(out_ref.dtype)

    return kernel


# ---------------------------------------------------------------------------
# Parameter init (PyTorch-Linear style) and one-time packing
# ---------------------------------------------------------------------------
def init_params(key, embed_dim, enc_hidden, latent_dim, dec_hidden):
    """Raw per-layer params; weights stored as (in, out)."""
    ks = jax.random.split(key, 6)

    def lin(k, fan_in, fan_out):
        s = 1.0 / jnp.sqrt(float(fan_in))
        kw, kb = jax.random.split(k)
        w = jax.random.uniform(kw, (fan_in, fan_out), minval=-s, maxval=s,
                               dtype=jnp.float32)
        b = jax.random.uniform(kb, (fan_out,), minval=-s, maxval=s,
                               dtype=jnp.float32)
        return w, b

    we1, be1 = lin(ks[0], embed_dim, enc_hidden)        # encoder layer 1
    we2, be2 = lin(ks[1], enc_hidden, latent_dim)       # encoder layer 2
    wp1, bp1 = lin(ks[2], embed_dim, enc_hidden)        # encoder_prior layer 1
    wp2, bp2 = lin(ks[3], enc_hidden, latent_dim)       # encoder_prior layer 2
    wd1, bd1 = lin(ks[4], 2 * latent_dim + 1, dec_hidden)  # decoder layer 1
    wd2, bd2 = lin(ks[5], dec_hidden, embed_dim)        # decoder layer 2
    return (we1, be1, we2, be2, wp1, bp1, wp2, bp2, wd1, bd1, wd2, bd2)


def pack_params(params, embed_dim, enc_hidden, latent_dim, dec_hidden,
                compute_dtype=jnp.bfloat16):
    """Build the fused / padded weight and bias slabs (done once, not per call)."""
    (we1, be1, we2, be2, wp1, bp1, wp2, bp2, wd1, bd1, wd2, bd2) = params
    D, H, L, DH, OUT = embed_dim, enc_hidden, latent_dim, dec_hidden, embed_dim
    P = _round_up(max(2 * D, 2 * H, 2 * L, DH, OUT), 8)

    def blkdiag(a, b):
        z = jnp.zeros((a.shape[0] + b.shape[0], a.shape[1] + b.shape[1]),
                      jnp.float32)
        return z.at[:a.shape[0], :a.shape[1]].set(a) \
                .at[a.shape[0]:, a.shape[1]:].set(b)

    def pad2(m):
        return jnp.zeros((P, P), jnp.float32).at[:m.shape[0], :m.shape[1]].set(m)

    def padrow(v):
        v = v.reshape(1, -1)
        return jnp.zeros((1, P), jnp.float32).at[:, :v.shape[1]].set(v)

    w1 = pad2(blkdiag(we1, wp1))            # real part (2D, 2H)
    w2 = pad2(blkdiag(we2, wp2))            # real part (2H, 2L)
    w3 = pad2(wd1[:2 * L, :])               # real part (2L, DH)
    w4 = pad2(wd2)                          # real part (DH, OUT)
    wpack = jnp.concatenate([w1, w2, w3, w4], axis=0).astype(compute_dtype)

    bpack = jnp.concatenate([
        padrow(jnp.concatenate([be1.reshape(-1), bp1.reshape(-1)])),
        padrow(jnp.concatenate([be2.reshape(-1), bp2.reshape(-1)])),
        padrow(bd1),
        padrow(bd2),
        padrow(wd1[2 * L]),                 # t-column of decoder Linear 1
        jnp.zeros((3, P), jnp.float32),
    ], axis=0)                              # (8, P), f32

    return dict(w=wpack, b=bpack, P=int(P), D=int(D), OUT=int(OUT),
                compute_dtype=compute_dtype)


# ---------------------------------------------------------------------------
# Forward wrapper (reproduces DiffusionEmbeddingMapper.forward semantics)
# ---------------------------------------------------------------------------
def diffusion_forward(inputs, prior, packed, alphas_bar, total_time, key,
                      num_points=1):
    D, P, OUT = packed["D"], packed["P"], packed["OUT"]

    # NOTE: prior is tiled alongside inputs (fixes num_points > 1 shape bug).
    x = jnp.tile(inputs, (num_points, 1)).astype(jnp.float32)
    pr = jnp.tile(prior, (num_points, 1)).astype(jnp.float32)
    n, d = x.shape
    assert d == D

    kt, kn = jax.random.split(key)
    t = jax.random.randint(kt, (n,), 0, total_time, dtype=jnp.int32)
    noise = jax.random.normal(kn, (n, d), dtype=jnp.float32)
    chosen_ab = alphas_bar[t].astype(jnp.float32)
    t_norm = t.astype(jnp.float32) / float(total_time)

    # Row blocking: multiples of 8 sublanes, up to 128 rows per grid step.
    TB = 128 if n >= 128 else _round_up(n, 8)
    n_pad = _round_up(n, TB)

    # Packed per-row data operand, width 2P: [x | prior | 0 | noise | 0].
    pieces = [x, pr]
    if P > 2 * D:
        pieces.append(jnp.zeros((n, P - 2 * D), jnp.float32))
    pieces.append(noise)
    if P > D:
        pieces.append(jnp.zeros((n, P - D), jnp.float32))
    data = jnp.concatenate(pieces, axis=1)
    data = jnp.pad(data, ((0, n_pad - n), (0, 0)))

    # Packed per-row scalars: [alphas_bar[t], t/T, pad...] -> (n_pad, 8).
    scal = jnp.concatenate(
        [chosen_ab[:, None], t_norm[:, None], jnp.zeros((n, 6), jnp.float32)],
        axis=1)
    scal = jnp.pad(scal, ((0, n_pad - n), (0, 0)))

    kernel = _make_kernel(D, P, OUT, packed["compute_dtype"])
    out = pl.pallas_call(
        kernel,
        out_shape=jax.ShapeDtypeStruct((n_pad, OUT), jnp.float32),
        grid=(n_pad // TB,),
        in_specs=[
            pl.BlockSpec((TB, 2 * P), lambda i: (i, 0)),   # per-row data (streamed)
            pl.BlockSpec((TB, 8), lambda i: (i, 0)),       # per-row scalars
            pl.BlockSpec((4 * P, P), lambda i: (0, 0)),    # weights (resident)
            pl.BlockSpec((8, P), lambda i: (0, 0)),        # biases + t-weight
        ],
        out_specs=pl.BlockSpec((TB, OUT), lambda i: (i, 0)),
        compiler_params=pltpu.CompilerParams(
            dimension_semantics=("parallel",)),
    )(data, scal, packed["w"], packed["b"])

    return out[:n], noise


# ---------------------------------------------------------------------------
# Pure-JAX reference (f32), mirroring the module + identical RNG derivation
# ---------------------------------------------------------------------------
def reference_forward(inputs, prior, params, alphas_bar, total_time, key,
                      num_points=1):
    (we1, be1, we2, be2, wp1, bp1, wp2, bp2, wd1, bd1, wd2, bd2) = params
    x = jnp.tile(inputs, (num_points, 1))
    pr = jnp.tile(prior, (num_points, 1))
    n, d = x.shape
    kt, kn = jax.random.split(key)
    t = jax.random.randint(kt, (n,), 0, total_time, dtype=jnp.int32)
    noise = jax.random.normal(kn, (n, d), dtype=jnp.float32)
    ab = alphas_bar[t]
    noisy = x * jnp.sqrt(ab)[:, None] + noise * jnp.sqrt(1.0 - ab)[:, None]
    tn = (t.astype(jnp.float32) / float(total_time))[:, None]
    x1 = jnp.maximum(noisy @ we1 + be1, 0.0) @ we2 + be2
    x2 = jnp.maximum(pr @ wp1 + bp1, 0.0) @ wp2 + bp2
    z = jnp.maximum(jnp.concatenate([x1, x2, tn], axis=1) @ wd1 + bd1, 0.0)
    return z @ wd2 + bd2, noise


if __name__ == "__main__":
    # mlp_sizes = [32, 16, 32] -> encoder hidden 32, latent 16, decoder hidden 32.
    embed_dim, enc_hidden, latent_dim, dec_hidden = 32, 32, 16, 32
    total_time = 100
    batch = 8
    num_points = 1

    key = jax.random.PRNGKey(0)
    k_in, k_pr, k_par, k_fwd = jax.random.split(key, 4)

    inputs = jax.random.normal(k_in, (batch, embed_dim), dtype=jnp.float32)
    prior = jax.random.normal(k_pr, (batch, embed_dim), dtype=jnp.float32)
    params = init_params(k_par, embed_dim, enc_hidden, latent_dim, dec_hidden)
    packed = pack_params(params, embed_dim, enc_hidden, latent_dim, dec_hidden,
                         compute_dtype=jnp.bfloat16)

    # Diffusion schedule (as in __init__).
    betas = jnp.linspace(1e-4, 0.02, total_time, dtype=jnp.float32)
    alphas_bar = jnp.cumprod(1.0 - betas)

    noise_pred, noise = diffusion_forward(inputs, prior, packed, alphas_bar,
                                          total_time, k_fwd,
                                          num_points=num_points)
    jax.block_until_ready((noise_pred, noise))

    ref_pred, ref_noise = reference_forward(inputs, prior, params, alphas_bar,
                                            total_time, k_fwd,
                                            num_points=num_points)

    assert noise_pred.shape == (batch * num_points, embed_dim)
    assert noise.shape == (batch * num_points, embed_dim)
    assert jnp.allclose(noise, ref_noise)
    # bf16 matmuls inside the kernel vs f32 reference -> loose tolerance.
    assert jnp.allclose(noise_pred, ref_pred, atol=7.5e-2, rtol=7.5e-2), (
        float(jnp.max(jnp.abs(noise_pred - ref_pred))))
    print("KERNEL_OK")
</pallas_src>

<mosaic_0001>
module attributes {stable_mosaic.version = 11 : i64} {
  func.func @kernel(%arg0: i32, %arg1: memref<8x128xf32, #tpu.memory_space<vmem>>, %arg2: memref<8x8xf32, #tpu.memory_space<vmem>>, %arg3: memref<256x64xbf16, #tpu.memory_space<vmem>>, %arg4: memref<8x64xf32, #tpu.memory_space<vmem>>, %arg5: memref<8x32xf32, #tpu.memory_space<vmem>>) attributes {dimension_semantics = [#tpu.dimension_semantics<parallel>], iteration_bounds = array<i64: 1>, scalar_prefetch = 0 : i64, scratch_operands = 0 : i64, tpu.core_type = #tpu.core_type<tc>, window_params = [{transform_indices = @transform_0, window_bounds = array<i64: 8, 128>}, {transform_indices = @transform_1, window_bounds = array<i64: 8, 8>}, {pipeline_mode = #tpu.pipeline_mode<synchronous>, transform_indices = @transform_2, window_bounds = array<i64: 256, 64>}, {pipeline_mode = #tpu.pipeline_mode<synchronous>, transform_indices = @transform_3, window_bounds = array<i64: 8, 64>}, {transform_indices = @transform_4, window_bounds = array<i64: 8, 32>}]} {
    %c0 = arith.constant 0 : index
    %c0_0 = arith.constant 0 : index
    %0 = vector.load %arg2[%c0, %c0_0] : memref<8x8xf32, #tpu.memory_space<vmem>>, vector<8x1xf32>
    %c0_1 = arith.constant 0 : index
    %c1 = arith.constant 1 : index
    %1 = vector.load %arg2[%c0_1, %c1] : memref<8x8xf32, #tpu.memory_space<vmem>>, vector<8x1xf32>
    %2 = math.sqrt %0 : vector<8x1xf32>
    %cst = arith.constant 1.000000e+00 : f32
    %3 = vector.broadcast %cst : f32 to vector<8x1xf32>
    %4 = arith.subf %3, %0 : vector<8x1xf32>
    %5 = math.sqrt %4 : vector<8x1xf32>
    %c0_2 = arith.constant 0 : index
    %c0_3 = arith.constant 0 : index
    %6 = vector.load %arg1[%c0_2, %c0_3] : memref<8x128xf32, #tpu.memory_space<vmem>>, vector<8x64xf32>
    %c0_4 = arith.constant 0 : index
    %c64 = arith.constant 64 : index
    %7 = vector.load %arg1[%c0_4, %c64] : memref<8x128xf32, #tpu.memory_space<vmem>>, vector<8x64xf32>
    %8 = tpu.iota {dimensions = array<i32: 1>} : vector<8x64xi32>
    %9 = vector.shape_cast %2 : vector<8x1xf32> to vector<8x1xf32>
    %10 = vector.broadcast %9 : vector<8x1xf32> to vector<8x64xf32>
    %c32_i32 = arith.constant 32 : i32
    %11 = vector.broadcast %c32_i32 : i32 to vector<8x64xi32>
    %12 = arith.cmpi slt, %8, %11 : vector<8x64xi32>
    %cst_5 = arith.constant 1.000000e+00 : f32
    %13 = vector.broadcast %cst_5 : f32 to vector<8x64xf32>
    %14 = arith.select %12, %10, %13 : vector<8x64xi1>, vector<8x64xf32>
    %15 = arith.mulf %6, %14 : vector<8x64xf32>
    %16 = vector.broadcast %5 : vector<8x1xf32> to vector<8x64xf32>
    %17 = arith.mulf %7, %16 : vector<8x64xf32>
    %18 = arith.addf %15, %17 : vector<8x64xf32>
    %c0_6 = arith.constant 0 : index
    %c0_7 = arith.constant 0 : index
    %19 = vector.load %arg3[%c0_6, %c0_7] : memref<256x64xbf16, #tpu.memory_space<vmem>>, vector<64x64xbf16>
    %c64_8 = arith.constant 64 : index
    %c0_9 = arith.constant 0 : index
    %20 = vector.load %arg3[%c64_8, %c0_9] : memref<256x64xbf16, #tpu.memory_space<vmem>>, vector<64x64xbf16>
    %c128 = arith.constant 128 : index
    %c0_10 = arith.constant 0 : index
    %21 = vector.load %arg3[%c128, %c0_10] : memref<256x64xbf16, #tpu.memory_space<vmem>>, vector<64x64xbf16>
    %c192 = arith.constant 192 : index
    %c0_11 = arith.constant 0 : index
    %22 = vector.load %arg3[%c192, %c0_11] : memref<256x64xbf16, #tpu.memory_space<vmem>>, vector<64x64xbf16>
    %c0_12 = arith.constant 0 : index
    %c0_13 = arith.constant 0 : index
    %23 = vector.load %arg4[%c0_12, %c0_13] : memref<8x64xf32, #tpu.memory_space<vmem>>, vector<1x64xf32>
    %c1_14 = arith.constant 1 : index
    %c0_15 = arith.constant 0 : index
    %24 = vector.load %arg4[%c1_14, %c0_15] : memref<8x64xf32, #tpu.memory_space<vmem>>, vector<1x64xf32>
    %c2 = arith.constant 2 : index
    %c0_16 = arith.constant 0 : index
    %25 = vector.load %arg4[%c2, %c0_16] : memref<8x64xf32, #tpu.memory_space<vmem>>, vector<1x64xf32>
    %c3 = arith.constant 3 : index
    %c0_17 = arith.constant 0 : index
    %26 = vector.load %arg4[%c3, %c0_17] : memref<8x64xf32, #tpu.memory_space<vmem>>, vector<1x64xf32>
    %c4 = arith.constant 4 : index
    %c0_18 = arith.constant 0 : index
    %27 = vector.load %arg4[%c4, %c0_18] : memref<8x64xf32, #tpu.memory_space<vmem>>, vector<1x64xf32>
    %28 = arith.truncf %18 : vector<8x64xf32> to vector<8x64xbf16>
    %cst_19 = arith.constant dense<0.000000e+00> : vector<8x64xf32>
    %29 = tpu.matmul %28, %19, %cst_19 {dimension_numbers = #tpu.dot_dimension_numbers<[1], [0], [0], [1], [0, 0, 1, 1], [], []>} : vector<8x64xbf16>, vector<64x64xbf16>, vector<8x64xf32> -> vector<8x64xf32>
    %30 = vector.broadcast %23 : vector<1x64xf32> to vector<8x64xf32>
    %31 = arith.addf %29, %30 : vector<8x64xf32>
    %cst_20 = arith.constant 0.000000e+00 : f32
    %32 = vector.broadcast %cst_20 : f32 to vector<8x64xf32>
    %33 = arith.maximumf %31, %32 : vector<8x64xf32>
    %34 = arith.truncf %33 : vector<8x64xf32> to vector<8x64xbf16>
    %cst_21 = arith.constant dense<0.000000e+00> : vector<8x64xf32>
    %35 = tpu.matmul %34, %20, %cst_21 {dimension_numbers = #tpu.dot_dimension_numbers<[1], [0], [0], [1], [0, 0, 1, 1], [], []>} : vector<8x64xbf16>, vector<64x64xbf16>, vector<8x64xf32> -> vector<8x64xf32>
    %36 = vector.broadcast %24 : vector<1x64xf32> to vector<8x64xf32>
    %37 = arith.addf %35, %36 : vector<8x64xf32>
    %38 = arith.truncf %37 : vector<8x64xf32> to vector<8x64xbf16>
    %cst_22 = arith.constant dense<0.000000e+00> : vector<8x64xf32>
    %39 = tpu.matmul %38, %21, %cst_22 {dimension_numbers = #tpu.dot_dimension_numbers<[1], [0], [0], [1], [0, 0, 1, 1], [], []>} : vector<8x64xbf16>, vector<64x64xbf16>, vector<8x64xf32> -> vector<8x64xf32>
    %40 = vector.broadcast %1 : vector<8x1xf32> to vector<8x64xf32>
    %41 = vector.broadcast %27 : vector<1x64xf32> to vector<8x64xf32>
    %42 = arith.mulf %40, %41 : vector<8x64xf32>
    %43 = arith.addf %39, %42 : vector<8x64xf32>
    %44 = vector.broadcast %25 : vector<1x64xf32> to vector<8x64xf32>
    %45 = arith.addf %43, %44 : vector<8x64xf32>
    %cst_23 = arith.constant 0.000000e+00 : f32
    %46 = vector.broadcast %cst_23 : f32 to vector<8x64xf32>
    %47 = arith.maximumf %45, %46 : vector<8x64xf32>
    %48 = arith.truncf %47 : vector<8x64xf32> to vector<8x64xbf16>
    %cst_24 = arith.constant dense<0.000000e+00> : vector<8x64xf32>
    %49 = tpu.matmul %48, %22, %cst_24 {dimension_numbers = #tpu.dot_dimension_numbers<[1], [0], [0], [1], [0, 0, 1, 1], [], []>} : vector<8x64xbf16>, vector<64x64xbf16>, vector<8x64xf32> -> vector<8x64xf32>
    %50 = vector.broadcast %26 : vector<1x64xf32> to vector<8x64xf32>
    %51 = arith.addf %49, %50 : vector<8x64xf32>
    %52 = vector.extract_strided_slice %51 {offsets = [0, 0], sizes = [8, 32], strides = [1, 1]} : vector<8x64xf32> to vector<8x32xf32>
    %c0_25 = arith.constant 0 : index
    %c0_26 = arith.constant 0 : index
    %53 = vector.load %arg5[%c0_25, %c0_26] : memref<8x32xf32, #tpu.memory_space<vmem>>, vector<8x32xf32>
    tpu.vector_store %arg5[%c0_25, %c0_26], %52 {strides = array<i32>} : memref<8x32xf32, #tpu.memory_space<vmem>>, vector<8x32xf32>,
    return
  }
  func.func @transform_0(%arg0: i32) -> (i32, i32) {
    %c0_i32 = arith.constant 0 : i32
    %c0_i32_0 = arith.constant 0 : i32
    return %arg0, %c0_i32 : i32, i32
  }
  func.func @transform_1(%arg0: i32) -> (i32, i32) {
    %c0_i32 = arith.constant 0 : i32
    %c0_i32_0 = arith.constant 0 : i32
    return %arg0, %c0_i32 : i32, i32
  }
  func.func @transform_2(%arg0: i32) -> (i32, i32) {
    %c0_i32 = arith.constant 0 : i32
    %c0_i32_0 = arith.constant 0 : i32
    %c0_i32_1 = arith.constant 0 : i32
    return %c0_i32, %c0_i32_0 : i32, i32
  }
  func.func @transform_3(%arg0: i32) -> (i32, i32) {
    %c0_i32 = arith.constant 0 : i32
    %c0_i32_0 = arith.constant 0 : i32
    %c0_i32_1 = arith.constant 0 : i32
    return %c0_i32, %c0_i32_0 : i32, i32
  }
  func.func @transform_4(%arg0: i32) -> (i32, i32) {
    %c0_i32 = arith.constant 0 : i32
    %c0_i32_0 = arith.constant 0 : i32
    return %arg0, %c0_i32 : i32, i32
  }
}

</mosaic_0001>

<llo_original>
// kernel: tpu_custom_call.1
$region0: #{tpu_custom_call.1}
  #allocation0 [shape = 'u32[]', space=smem, size = 0x4, offset = 0x4, fixed_abs, tag = 'smem constant byte address 0x4 - core index']
  #allocation1 [shape = 'u32[72,128]{1,0:T(1,128)}', space=vmem, size = 0x9000, scoped, tag = 'internal scratch']
  %s0 = inlined_call_operand.vmem [shape: f32[8,128], index: 0, kind: input, shape index: {}]
  %s1 = inlined_call_operand.vmem [shape: f32[8,8], index: 1, kind: input, shape index: {}]
  %s2 = inlined_call_operand.vmem [shape: bf16[256,64], index: 2, kind: input, shape index: {}]
  %s3 = inlined_call_operand.vmem [shape: f32[8,64], index: 3, kind: input, shape index: {}]
  %s4 = inlined_call_operand.hbm [shape: f32[8,32], index: 4, kind: output, shape index: {}]
  %s5 = sld [smem:[#allocation0]]
  $region26: #{tpu_custom_call.1} parent=0
    _
  %s7 = ssub.s32 1, %s5
  %s8 = scalar_select 0, %s7, %s5
  $region1: #{tpu_custom_call.1} parent=0
    #allocation2 [shape = 'u8[4096]{0}', space=vmem, size = 0x1000, scoped, tag = 'output window, operand 0, single buffered']
    #allocation3 [shape = 's32[1]{0}', space=sflag, size = 0x4, scoped, tag = 'scoped memory for tpu_custom_call.1']
    %9 = vsyncpa [#allocation3], 0
    // Predicated region
    $region2: #{tpu_custom_call.1} parent=1 // pred_check
      _
    $region3: #{tpu_custom_call.1} parent=1 // pred_check_branch
      %11 = sbr.rel (0) target = $region5
    $region4: #{tpu_custom_call.1} parent=1 // pred_region
      _
    $region5: #{tpu_custom_call.1} parent=1 // pred_fallthru
      _
    // Predicated region
    $region6: #{tpu_custom_call.1} parent=1 // pred_check
      _
    $region7: #{tpu_custom_call.1} parent=1 // pred_check_branch
      %13 = sbr.rel (0) target = $region9
    $region8: #{tpu_custom_call.1} parent=1 // pred_region
      _
    $region9: #{tpu_custom_call.1} parent=1 // pred_fallthru
      _
    // Predicated region
    $region10: #{tpu_custom_call.1} parent=1 // pred_check
      _
    $region11: #{tpu_custom_call.1} parent=1 // pred_check_branch
      %15 = sbr.rel (0) target = $region13
    $region12: #{tpu_custom_call.1} parent=1 // pred_region
      _
    $region13: #{tpu_custom_call.1} parent=1 // pred_fallthru
      _
    // Predicated region
    $region14: #{tpu_custom_call.1} parent=1 // pred_check
      _
    $region15: #{tpu_custom_call.1} parent=1 // pred_check_branch
      %17 = sbr.rel (0) target = $region17
    $region16: #{tpu_custom_call.1} parent=1 // pred_region
      _
    $region17: #{tpu_custom_call.1} parent=1 // pred_fallthru
      _
    %v19 = vld [vmem:[%s1] sm:$0xff]
    %v20 = vrsqrt.pop %v19
    %v21 = vmul.f32 %v20, %v19
    %v22 = vmul.f32 %v21, %v20
    %v23 = vmul.f32 0.5, %v22
    %v24 = vsub.f32 1.5, %v23
    %v25 = vmul.f32 %v20, %v24
    %v26 = vmul.f32 %v19, %v25
    %vm27 = vcmp.eq.f32.partialorder %v19, inf
    %v28 = vsel %vm27, %v19, %v26
    %vm29 = vcmp.eq.f32.partialorder %v19, 0.0
    %v30 = vand.u32 %v19, 2147483648
    %v31 = vsel %vm29, %v30, %v28
    %v32 = vsub.f32 1.0, %v19
    %v33 = vrsqrt.pop %v32
    %v34 = vmul.f32 %v33, %v32
    %v35 = vmul.f32 %v34, %v33
    %v36 = vmul.f32 0.5, %v35
    %v37 = vsub.f32 1.5, %v36
    %v38 = vmul.f32 %v33, %v37
    %v39 = vmul.f32 %v32, %v38
    %vm40 = vcmp.eq.f32.partialorder %v32, inf
    %v41 = vsel %vm40, %v32, %v39
    %vm42 = vcmp.eq.f32.partialorder %v32, 0.0
    %v43 = vand.u32 %v32, 2147483648
    %v44 = vsel %vm42, %v43, %v41
    %v45 = vld [vmem:[%s0] sm:$0xff]
    %v46 = vlaneseq
    %v47 = vand.u32 %v46, 127
    %49 = vset.pattern.permute.xlu0 0
    %50 = vperm.xlu0 %49, %v31
    %v51 = vpop.permute.xlu0 %50
    %vm53 = vcmp.lt.s32.totalorder %v47, 32
    %v54 = vsel %vm53, %v51, 1.0
    %v55 = vmul.f32 %v45, %v54
    %57 = vset.pattern.permute.xlu0 0
    %58 = vperm.xlu0 %57, %v44
    %v59 = vpop.permute.xlu0 %58
    %v61 = vmul.f32 %v45, %v59
    %63 = vrot.lane.b32.xlu0 %v61, 64
    %v64 = vpop.permute.xlu0 %63
    %v66 = vadd.f32 %v55, %v64
    %v67 = vld [vmem:[%s2] sm:$0xf]
    %v68 = vld [vmem:[%s2 + $0x4] sm:$0xf]
    %v69 = vld [vmem:[%s2 + $0x8] sm:$0xf]
    %v70 = vld [vmem:[%s2 + $0xc] sm:$0xf]
    %v71 = vld [vmem:[%s2 + $0x10] sm:$0xf]
    %v72 = vld [vmem:[%s2 + $0x14] sm:$0xf]
    %v73 = vld [vmem:[%s2 + $0x18] sm:$0xf]
    %v74 = vld [vmem:[%s2 + $0x1c] sm:$0xf]
    %v75 = vld [vmem:[%s2 + $0x20] sm:$0xf]
    %v76 = vld [vmem:[%s2 + $0x24] sm:$0xf]
    %v77 = vld [vmem:[%s2 + $0x28] sm:$0xf]
    %v78 = vld [vmem:[%s2 + $0x2c] sm:$0xf]
    %v79 = vld [vmem:[%s2 + $0x30] sm:$0xf]
    %v80 = vld [vmem:[%s2 + $0x34] sm:$0xf]
    %v81 = vld [vmem:[%s2 + $0x38] sm:$0xf]
    %v82 = vld [vmem:[%s2 + $0x3c] sm:$0xf]
    %v83 = vld [vmem:[%s2 + $0x40] sm:$0xf]
    %v84 = vld [vmem:[%s2 + $0x44] sm:$0xf]
    %v85 = vld [vmem:[%s2 + $0x48] sm:$0xf]
    %v86 = vld [vmem:[%s2 + $0x4c] sm:$0xf]
    %v87 = vld [vmem:[%s2 + $0x50] sm:$0xf]
    %v88 = vld [vmem:[%s2 + $0x54] sm:$0xf]
    %v89 = vld [vmem:[%s2 + $0x58] sm:$0xf]
    %v90 = vld [vmem:[%s2 + $0x5c] sm:$0xf]
    %v91 = vld [vmem:[%s2 + $0x60] sm:$0xf]
    %v92 = vld [vmem:[%s2 + $0x64] sm:$0xf]
    %v93 = vld [vmem:[%s2 + $0x68] sm:$0xf]
    %v94 = vld [vmem:[%s2 + $0x6c] sm:$0xf]
    %v95 = vld [vmem:[%s2 + $0x70] sm:$0xf]
    %v96 = vld [vmem:[%s2 + $0x74] sm:$0xf]
    %v97 = vld [vmem:[%s2 + $0x78] sm:$0xf]
    %v98 = vld [vmem:[%s2 + $0x7c] sm:$0xf]
    %v99 = vld [vmem:[%s3] sm:$0x1]
    %v100 = vld [vmem:[%s3 + $0x1] sm:$0x1]
    %v101 = vld [vmem:[%s3 + $0x2] sm:$0x1]
    %v102 = vld [vmem:[%s3 + $0x3] sm:$0x1]
    %v103 = vld [vmem:[%s3 + $0x4] sm:$0x1]
    %v104 = vpack.c.bf16 %v66, %v66
    %v105 = vperm.slane %v99, 0
    %v114 = vunpack.c.l.b16 %v67
    %v115 = vunpack.c.l.b16 %v68
    %v116 = vunpack.c.l.b16 %v69
    %v117 = vunpack.c.l.b16 %v70
    %v118 = vunpack.c.l.b16 %v71
    %v119 = vunpack.c.l.b16 %v72
    %v120 = vunpack.c.l.b16 %v73
    %v121 = vunpack.c.l.b16 %v74
    %v122 = vpack.c.b16 %v115, %v114
    %v123 = vpack.c.b16 %v117, %v116
    %v124 = vpack.c.b16 %v119, %v118
    %v125 = vpack.c.b16 %v121, %v120
    %vm130 = vcmask 523264
    %v132 = vsel %vm130, %v104, 0
    %134 = vmatpush.bf16.msra.mxu0 0
    %135 = vmatpush.bf16.msra.mxu0 0
    %136 = vmatpush.bf16.msra.mxu0 0
    %137 = vmatpush.bf16.msra.mxu0 0
    %138 = vmatpush.bf16.msra.mxu0 %v125
    %139 = vmatpush.bf16.msra.mxu0 %v124
    %140 = vmatpush.bf16.msra.mxu0 %v123
    %141 = vmatpush.bf16.msra.mxu0 %v122
    %142 = vmatmul.bf16.gmra.mxu0 %v132
    %v143 = vpop.f32.mrf.mxu0
    %v144 = vadd.f32 %v105, %v143
    %v145 = vpop.f32.mrf.mxu0
    %146 = vdwg.mxu0
    %v147 = vmax.f32 %v144, 0.0
    %v148 = vpack.c.bf16 %v147, %v147
    %v149 = vperm.slane %v100, 0
    %v158 = vunpack.c.l.b16 %v75
    %v159 = vunpack.c.l.b16 %v76
    %v160 = vunpack.c.l.b16 %v77
    %v161 = vunpack.c.l.b16 %v78
    %v162 = vunpack.c.l.b16 %v79
    %v163 = vunpack.c.l.b16 %v80
    %v164 = vunpack.c.l.b16 %v81
    %v165 = vunpack.c.l.b16 %v82
    %v166 = vpack.c.b16 %v159, %v158
    %v167 = vpack.c.b16 %v161, %v160
    %v168 = vpack.c.b16 %v163, %v162
    %v169 = vpack.c.b16 %v165, %v164
    %v175 = vsel %vm130, %v148, 0
    %177 = vmatpush.bf16.msra.mxu0 0
    %178 = vmatpush.bf16.msra.mxu0 0
    %179 = vmatpush.bf16.msra.mxu0 0
    %180 = vmatpush.bf16.msra.mxu0 0
    %181 = vmatpush.bf16.msra.mxu0 %v169
    %182 = vmatpush.bf16.msra.mxu0 %v168
    %183 = vmatpush.bf16.msra.mxu0 %v167
    %184 = vmatpush.bf16.msra.mxu0 %v166
    %185 = vmatmul.bf16.gmra.mxu0 %v175
    %v186 = vpop.f32.mrf.mxu0
    %v187 = vadd.f32 %v149, %v186
    %v188 = vpop.f32.mrf.mxu0
    %189 = vdwg.mxu0
    %v190 = vpack.c.bf16 %v187, %v187
    %192 = vset.pattern.permute.xlu0 1
    %193 = vperm.xlu0 %192, %v19
    %v194 = vpop.permute.xlu0 %193
    %v196 = vperm.slane %v103, 0
    %v197 = vmul.f32 %v194, %v196
    %v206 = vunpack.c.l.b16 %v83
    %v207 = vunpack.c.l.b16 %v84
    %v208 = vunpack.c.l.b16 %v85
    %v209 = vunpack.c.l.b16 %v86
    %v210 = vunpack.c.l.b16 %v87
    %v211 = vunpack.c.l.b16 %v88
    %v212 = vunpack.c.l.b16 %v89
    %v213 = vunpack.c.l.b16 %v90
    %v214 = vpack.c.b16 %v207, %v206
    %v215 = vpack.c.b16 %v209, %v208
    %v216 = vpack.c.b16 %v211, %v210
    %v217 = vpack.c.b16 %v213, %v212
    %v223 = vsel %vm130, %v190, 0
    %225 = vmatpush.bf16.msra.mxu0 0
    %226 = vmatpush.bf16.msra.mxu0 0
    %227 = vmatpush.bf16.msra.mxu0 0
    %228 = vmatpush.bf16.msra.mxu0 0
    %229 = vmatpush.bf16.msra.mxu0 %v217
    %230 = vmatpush.bf16.msra.mxu0 %v216
    %231 = vmatpush.bf16.msra.mxu0 %v215
    %232 = vmatpush.bf16.msra.mxu0 %v214
    %233 = vmatmul.bf16.gmra.mxu0 %v223
    %v234 = vpop.f32.mrf.mxu0
    %v235 = vadd.f32 %v197, %v234
    %v236 = vpop.f32.mrf.mxu0
    %237 = vdwg.mxu0
    %v238 = vperm.slane %v101, 0
    %v239 = vadd.f32 %v235, %v238
    %v240 = vmax.f32 %v239, 0.0
    %v241 = vpack.c.bf16 %v240, %v240
    %v242 = vperm.slane %v102, 0
    %v251 = vunpack.c.l.b16 %v91
    %v252 = vunpack.c.l.b16 %v92
    %v253 = vunpack.c.l.b16 %v93
    %v254 = vunpack.c.l.b16 %v94
    %v255 = vunpack.c.l.b16 %v95
    %v256 = vunpack.c.l.b16 %v96
    %v257 = vunpack.c.l.b16 %v97
    %v258 = vunpack.c.l.b16 %v98
    %v259 = vpack.c.b16 %v252, %v251
    %v260 = vpack.c.b16 %v254, %v253
    %v261 = vpack.c.b16 %v256, %v255
    %v262 = vpack.c.b16 %v258, %v257
    %v268 = vsel %vm130, %v241, 0
    %270 = vmatpush.bf16.msra.mxu0 0
    %271 = vmatpush.bf16.msra.mxu0 0
    %272 = vmatpush.bf16.msra.mxu0 0
    %273 = vmatpush.bf16.msra.mxu0 0
    %274 = vmatpush.bf16.msra.mxu0 %v262
    %275 = vmatpush.bf16.msra.mxu0 %v261
    %276 = vmatpush.bf16.msra.mxu0 %v260
    %277 = vmatpush.bf16.msra.mxu0 %v259
    %278 = vmatmul.bf16.gmra.mxu0 %v268
    %v279 = vpop.f32.mrf.mxu0
    %v280 = vadd.f32 %v242, %v279
    %v281 = vpop.f32.mrf.mxu0
    %282 = vdwg.mxu0
    %vm283 = vcmask 261120
    %284 = vst.msk [vmem:[#allocation2] sm:$0xff] %vm283, %v280
    // Predicated region
    $region18: #{tpu_custom_call.1} parent=1 // pred_check
      _
    $region19: #{tpu_custom_call.1} parent=1 // pred_check_branch
      %286 = sbr.rel (0) target = $region21
    $region20: #{tpu_custom_call.1} parent=1 // pred_region
      %288 = vsyncadd [#allocation3], 0
      %s290 = sshll.u32 [#allocation2], 4
      %s291 = int_to_ptr.vmem [resolvable:$true] %s290
      %s292 = sshll.u32 %s4, 4
      %s293 = int_to_ptr.hbm [resolvable:$true] %s292
      %295 = dma.vmem_to_hbm [thread:$0]  %s291, 128, %s293, [#allocation3]
    $region21: #{tpu_custom_call.1} parent=1 // pred_fallthru
      _
    // Predicated region
    $region22: #{tpu_custom_call.1} parent=1 // pred_check
      _
    $region23: #{tpu_custom_call.1} parent=1 // pred_check_branch
      %297 = sbr.rel (0) target = $region25
    $region24: #{tpu_custom_call.1} parent=1 // pred_region
      %299 = dma.done [#allocation3], 128
    $region25: #{tpu_custom_call.1} parent=1 // pred_fallthru
      _
    %300 = vsyncpa [#allocation3], 1

</llo_original>
